<compile_context>
chip_gen: v7x
topology: tpu7x:2x2x1
jax: 0.10.0
libtpu: 0.0.40
codegen_flags: <defaults>
</compile_context>

<pallas_src>
import functools

import jax
import jax.numpy as jnp
from jax.experimental import pallas as pl
from jax.experimental.pallas import tpu as pltpu


_LANE = 128
_VMEM_LIMIT_BYTES = 40 * 1024 * 1024    # explicit scoped-VMEM limit; safe on
                                        # v5e/v6e (128 MiB) and v7x (64 MiB).
_VMEM_BUDGET_BYTES = 20 * 1024 * 1024   # target for the working-set estimate
                                        # (2x headroom under the limit above).


def _round_up(x, m):
    return ((x + m - 1) // m) * m


def _vmem_working_set(tb, s, a, h, cd_bytes):
    """Conservative per-grid-step VMEM estimate used to size the batch tile."""
    io = 2 * tb * (s + a) * cd_bytes + 2 * tb * 4          # double-buffered IO
    weights = 2 * (((s + a) * h + h * h) * cd_bytes + (3 * h + 1) * 4)
    # f32 matmul accumulators + compute-dtype copies of h1/h2 + the f32
    # (tb, h) product of the final projection (upper bound, no buffer reuse).
    inter = 2 * tb * h * (4 + cd_bytes) + tb * h * 4
    return io + weights + inter


def _pick_batch_tile(batch, s, a, h, cd_bytes, block_b):
    """Largest batch tile that fits the VMEM budget, clamped to the batch,
    with >= 2 grid steps whenever possible (v7x dual-TensorCore split)."""
    b8 = _round_up(batch, 8)
    if block_b is not None:
        return min(_round_up(max(block_b, 8), 8), b8)
    tb = 8
    for cand in (8192, 4096, 2048, 1024, 512, 256, 128, 64, 32, 16, 8):
        if _vmem_working_set(cand, s, a, h, cd_bytes) <= _VMEM_BUDGET_BYTES:
            tb = cand
            break
    tb = min(tb, b8)
    if _round_up(batch, tb) // tb == 1 and b8 >= 16:
        tb = _round_up((b8 + 1) // 2, 8)    # split single tile across 2 TCs
    return tb


def _qnet_kernel(s_ref, a_ref, w1s_ref, w1a_ref, b1_ref, w2_ref, b2_ref,
                 w3_ref, b3_ref, out_ref):
    cd = w2_ref.dtype

    # Layer 1: h1 = relu(state @ W1_s + action @ W1_a + b1)   (MXU, f32 accum)
    h1 = jnp.dot(s_ref[...], w1s_ref[...], preferred_element_type=jnp.float32)
    h1 = h1 + jnp.dot(a_ref[...], w1a_ref[...],
                      preferred_element_type=jnp.float32)
    # Fused bias + ReLU + downcast: h1 carried in compute dtype (bf16 default).
    h1 = jnp.maximum(h1 + b1_ref[...], 0.0).astype(cd)           # (TB, H)

    # Layer 2: h2 = relu(h1 @ W2 + b2)                          (MXU, f32 accum)
    h2 = jnp.dot(h1, w2_ref[...], preferred_element_type=jnp.float32)
    h2 = jnp.maximum(h2 + b2_ref[...], 0.0).astype(cd)           # (TB, H)

    # Layer 3: H -> 1 projection on the VPU (mul, promoted to f32 by the f32
    # w3 row) + XLU lane reduce, instead of an N=1 MXU matmul.
    q = jnp.sum(h2 * w3_ref[...], axis=-1)                       # (TB,) f32

    # Lane-dense store: one (1, TB) row per tile (unmasked vst); the wrapper
    # reshapes the (num_tiles, TB) output back to (B, 1).
    out_ref[...] = (q.reshape(1, -1) + b3_ref[...]).astype(out_ref.dtype)


@functools.partial(jax.jit, static_argnames=("block_b", "compute_dtype"))
def qnetwork_forward(state, action, params, *, block_b=None,
                     compute_dtype=jnp.bfloat16):
    """Pallas-backed forward pass of the BCQ QNetwork.

    state:  (B, state_dim) float32
    action: (B, action_dim) or (B,) float32
    params: dict with w1 (S+A, H), b1 (1, H), w2 (H, H), b2 (1, H),
            w3 (H, 1), b3 (1, 1)  -- PyTorch Linear weights pre-transposed.
    returns (B, 1) float32

    compute_dtype=bfloat16 (default) quantizes inputs/weights/activations;
    pass compute_dtype=jnp.float32 for exact-f32 results (and on v5e).
    """
    if action.ndim == 1:
        action = action[:, None]
    B, S = state.shape
    A = action.shape[1]
    cd = jnp.dtype(compute_dtype)

    # ---- parameter prep (constant-folded under jit / pre-done in prod) ------
    w1 = params["w1"]
    b1 = params["b1"].reshape(1, -1)
    w2 = params["w2"]
    b2 = params["b2"].reshape(1, -1)
    w3 = params["w3"].reshape(-1, 1)
    b3 = params["b3"].reshape(1, 1)
    H0 = w2.shape[0]
    # MXU alignment insurance: pad H to a multiple of 128 with zeros (a
    # multiple of 256 is ideal on v6e/v7x).  No-op for the default H=256.
    H = max(_round_up(H0, _LANE), _LANE)
    if H != H0:
        p = H - H0
        w1 = jnp.pad(w1, ((0, 0), (0, p)))
        b1 = jnp.pad(b1, ((0, 0), (0, p)))
        w2 = jnp.pad(w2, ((0, p), (0, p)))
        b2 = jnp.pad(b2, ((0, 0), (0, p)))
        w3 = jnp.pad(w3, ((0, p), (0, 0)))

    # Split W1 so the kernel never needs a concatenated (B, S+A) array in HBM.
    w1s = w1[:S, :].astype(cd)                        # (S, H)
    w1a = w1[S:, :].astype(cd)                        # (A, H)
    w2 = w2.astype(cd)                                # (H, H)
    b1 = b1.astype(jnp.float32)                       # (1, H)
    b2 = b2.astype(jnp.float32)                       # (1, H)
    w3 = w3.reshape(1, H).astype(jnp.float32)         # (1, H) row
    b3 = b3.astype(jnp.float32)                       # (1, 1)

    # ---- batch tiling -------------------------------------------------------
    tb = _pick_batch_tile(B, S, A, H, cd.itemsize, block_b)
    b_pad = _round_up(B, tb)
    if b_pad != B:                                    # pad; extra rows dropped
        state = jnp.pad(state, ((0, b_pad - B), (0, 0)))
        action = jnp.pad(action, ((0, b_pad - B), (0, 0)))
    state = state.astype(cd)
    action = action.astype(cd)
    n_tiles = b_pad // tb

    # Advisory cost hint so XLA schedules this custom call against producers.
    flops = 2 * b_pad * H * (S + A + H + 1)
    bytes_accessed = (b_pad * (S + A) * cd.itemsize           # activations in
                      + ((S + A) * H + H * H) * cd.itemsize   # weights
                      + (3 * H + 1) * 4                       # biases + w3
                      + b_pad * 4)                            # q out

    out = pl.pallas_call(
        _qnet_kernel,
        out_shape=jax.ShapeDtypeStruct((n_tiles, tb), jnp.float32),
        grid=(n_tiles,),
        in_specs=[
            pl.BlockSpec((tb, S), lambda i: (i, 0)),   # state tile (pipelined)
            pl.BlockSpec((tb, A), lambda i: (i, 0)),   # action tile (pipelined)
            pl.BlockSpec((S, H), lambda i: (0, 0)),    # W1_s  (VMEM-resident)
            pl.BlockSpec((A, H), lambda i: (0, 0)),    # W1_a  (VMEM-resident)
            pl.BlockSpec((1, H), lambda i: (0, 0)),    # b1
            pl.BlockSpec((H, H), lambda i: (0, 0)),    # W2    (VMEM-resident)
            pl.BlockSpec((1, H), lambda i: (0, 0)),    # b2
            pl.BlockSpec((1, H), lambda i: (0, 0)),    # w3 row
            pl.BlockSpec((1, 1), lambda i: (0, 0)),    # b3
        ],
        out_specs=pl.BlockSpec((1, tb), lambda i: (i, 0)),  # lane-dense row
        compiler_params=pltpu.CompilerParams(
            dimension_semantics=("parallel",),          # 2-TC split on v7x
            vmem_limit_bytes=_VMEM_LIMIT_BYTES),
        cost_estimate=pl.CostEstimate(
            flops=flops, transcendentals=0, bytes_accessed=bytes_accessed),
    )(state, action, w1s, w1a, b1, w2, b2, w3, b3)

    return out.reshape(b_pad, 1)[:B]


def init_params(key, state_dim, action_dim, hidden_dim=256):
    """Deterministic synthetic parameters (PyTorch Linear shapes, pre-transposed)."""
    in_dim = state_dim + action_dim
    k1, k2, k3, k4, k5, k6 = jax.random.split(key, 6)

    def uniform(k, shape, fan_in):
        bound = 1.0 / jnp.sqrt(fan_in)
        return jax.random.uniform(k, shape, jnp.float32, -bound, bound)

    return {
        # stored as (in, out) = W^T; biases as (1, out) for clean broadcast
        "w1": uniform(k1, (in_dim, hidden_dim), in_dim),
        "b1": uniform(k2, (1, hidden_dim), in_dim),
        "w2": uniform(k3, (hidden_dim, hidden_dim), hidden_dim),
        "b2": uniform(k4, (1, hidden_dim), hidden_dim),
        "w3": uniform(k5, (hidden_dim, 1), hidden_dim),
        "b3": uniform(k6, (1, 1), hidden_dim),
    }


def _reference(state, action, params, compute_dtype=jnp.float32):
    """Plain-JAX mirror of the PyTorch QNetwork.forward (mirrors the kernel's
    quantization points when compute_dtype=bfloat16)."""
    if action.ndim == 1:
        action = action[:, None]
    cd = jnp.dtype(compute_dtype)
    sa = jnp.concatenate([state, action], axis=1).astype(cd)
    h1 = jnp.maximum(
        jnp.dot(sa, params["w1"].astype(cd),
                preferred_element_type=jnp.float32) + params["b1"], 0.0)
    h1 = h1.astype(cd)
    h2 = jnp.maximum(
        jnp.dot(h1, params["w2"].astype(cd),
                preferred_element_type=jnp.float32) + params["b2"], 0.0)
    h2 = h2.astype(cd)
    return jnp.dot(h2.astype(jnp.float32), params["w3"]) + params["b3"]


if __name__ == "__main__":
    key = jax.random.PRNGKey(0)
    kp, ks, ka, ka1 = jax.random.split(key, 4)

    # --- test 1: small shapes, exact f32 compute path -------------------------
    batch, state_dim, action_dim, hidden_dim = 8, 16, 8, 32
    params = init_params(kp, state_dim, action_dim, hidden_dim)
    state = jax.random.normal(ks, (batch, state_dim), jnp.float32)
    action = jax.random.normal(ka, (batch, action_dim), jnp.float32)

    q_f32 = jax.block_until_ready(
        qnetwork_forward(state, action, params, compute_dtype=jnp.float32))
    q_ref = _reference(state, action, params)
    assert q_f32.shape == (batch, 1)
    assert jnp.allclose(q_f32, q_ref, atol=1e-4, rtol=1e-4)

    # --- test 2: default bf16 MXU path vs. matching bf16 reference ------------
    q_bf16 = jax.block_until_ready(qnetwork_forward(state, action, params))
    q_ref_bf16 = _reference(state, action, params, compute_dtype=jnp.bfloat16)
    assert jnp.allclose(q_bf16, q_ref_bf16, atol=5e-3, rtol=5e-3)
    # loose sanity against the full-f32 reference (bf16 quantization error)
    assert jnp.allclose(q_bf16, q_ref, atol=1e-1, rtol=1e-1)

    # --- test 3: explicit tile -> multi-step grid + padding + 1-D action ------
    batch3 = 40                          # pads to 48 with block_b=16 -> grid=3
    params3 = init_params(kp, state_dim, 1, hidden_dim)
    state3 = jax.random.normal(ks, (batch3, state_dim), jnp.float32)
    action3 = jax.random.normal(ka1, (batch3,), jnp.float32)   # 1-D action
    q3 = jax.block_until_ready(
        qnetwork_forward(state3, action3, params3, block_b=16,
                         compute_dtype=jnp.float32))
    q3_ref = _reference(state3, action3, params3)
    assert q3.shape == (batch3, 1)
    assert jnp.allclose(q3, q3_ref, atol=1e-4, rtol=1e-4)

    # --- test 4: automatic tile selection (splits into >= 2 grid steps) -------
    q4 = jax.block_until_ready(
        qnetwork_forward(state3, action3, params3, compute_dtype=jnp.float32))
    assert q4.shape == (batch3, 1)
    assert jnp.allclose(q4, q3_ref, atol=1e-4, rtol=1e-4)

    print("KERNEL_OK")
</pallas_src>

<mosaic_0001>
module attributes {stable_mosaic.version = 11 : i64} {
  func.func @_qnet_kernel(%arg0: i32, %arg1: memref<8x16xf32, #tpu.memory_space<vmem>>, %arg2: memref<8x8xf32, #tpu.memory_space<vmem>>, %arg3: memref<16x128xf32, #tpu.memory_space<vmem>>, %arg4: memref<8x128xf32, #tpu.memory_space<vmem>>, %arg5: memref<1x128xf32, #tpu.memory_space<vmem>>, %arg6: memref<128x128xf32, #tpu.memory_space<vmem>>, %arg7: memref<1x128xf32, #tpu.memory_space<vmem>>, %arg8: memref<1x128xf32, #tpu.memory_space<vmem>>, %arg9: memref<1x1xf32, #tpu.memory_space<vmem>>, %arg10: memref<1x8xf32, #tpu.memory_space<vmem>>) attributes {dimension_semantics = [#tpu.dimension_semantics<parallel>], iteration_bounds = array<i64: 1>, scalar_prefetch = 0 : i64, scratch_operands = 0 : i64, tpu.core_type = #tpu.core_type<tc>, window_params = [{transform_indices = @transform_0, window_bounds = array<i64: 8, 16>}, {transform_indices = @transform_1, window_bounds = array<i64: 8, 8>}, {pipeline_mode = #tpu.pipeline_mode<synchronous>, transform_indices = @transform_2, window_bounds = array<i64: 16, 128>}, {pipeline_mode = #tpu.pipeline_mode<synchronous>, transform_indices = @transform_3, window_bounds = array<i64: 8, 128>}, {pipeline_mode = #tpu.pipeline_mode<synchronous>, transform_indices = @transform_4, window_bounds = array<i64: 1, 128>}, {pipeline_mode = #tpu.pipeline_mode<synchronous>, transform_indices = @transform_5, window_bounds = array<i64: 128, 128>}, {pipeline_mode = #tpu.pipeline_mode<synchronous>, transform_indices = @transform_6, window_bounds = array<i64: 1, 128>}, {pipeline_mode = #tpu.pipeline_mode<synchronous>, transform_indices = @transform_7, window_bounds = array<i64: 1, 128>}, {pipeline_mode = #tpu.pipeline_mode<synchronous>, transform_indices = @transform_8, window_bounds = array<i64: 1, 1>}, {transform_indices = @transform_9, window_bounds = array<i64: 1, 8>}]} {
    %c0 = arith.constant 0 : index
    %c0_0 = arith.constant 0 : index
    %0 = vector.load %arg1[%c0, %c0_0] : memref<8x16xf32, #tpu.memory_space<vmem>>, vector<8x16xf32>
    %c0_1 = arith.constant 0 : index
    %c0_2 = arith.constant 0 : index
    %1 = vector.load %arg3[%c0_1, %c0_2] : memref<16x128xf32, #tpu.memory_space<vmem>>, vector<16x128xf32>
    %cst = arith.constant dense<0.000000e+00> : vector<8x128xf32>
    %2 = tpu.matmul %0, %1, %cst {dimension_numbers = #tpu.dot_dimension_numbers<[1], [0], [0], [1], [0, 0, 1, 1], [], []>} : vector<8x16xf32>, vector<16x128xf32>, vector<8x128xf32> -> vector<8x128xf32>
    %c0_3 = arith.constant 0 : index
    %c0_4 = arith.constant 0 : index
    %3 = vector.load %arg2[%c0_3, %c0_4] : memref<8x8xf32, #tpu.memory_space<vmem>>, vector<8x8xf32>
    %c0_5 = arith.constant 0 : index
    %c0_6 = arith.constant 0 : index
    %4 = vector.load %arg4[%c0_5, %c0_6] : memref<8x128xf32, #tpu.memory_space<vmem>>, vector<8x128xf32>
    %cst_7 = arith.constant dense<0.000000e+00> : vector<8x128xf32>
    %5 = tpu.matmul %3, %4, %cst_7 {dimension_numbers = #tpu.dot_dimension_numbers<[1], [0], [0], [1], [0, 0, 1, 1], [], []>} : vector<8x8xf32>, vector<8x128xf32>, vector<8x128xf32> -> vector<8x128xf32>
    %6 = arith.addf %2, %5 : vector<8x128xf32>
    %c0_8 = arith.constant 0 : index
    %c0_9 = arith.constant 0 : index
    %7 = vector.load %arg5[%c0_8, %c0_9] : memref<1x128xf32, #tpu.memory_space<vmem>>, vector<1x128xf32>
    %8 = vector.broadcast %7 : vector<1x128xf32> to vector<8x128xf32>
    %9 = arith.addf %6, %8 : vector<8x128xf32>
    %cst_10 = arith.constant 0.000000e+00 : f32
    %10 = vector.broadcast %cst_10 : f32 to vector<8x128xf32>
    %11 = arith.maximumf %9, %10 : vector<8x128xf32>
    %c0_11 = arith.constant 0 : index
    %c0_12 = arith.constant 0 : index
    %12 = vector.load %arg6[%c0_11, %c0_12] : memref<128x128xf32, #tpu.memory_space<vmem>>, vector<128x128xf32>
    %cst_13 = arith.constant dense<0.000000e+00> : vector<8x128xf32>
    %13 = tpu.matmul %11, %12, %cst_13 {dimension_numbers = #tpu.dot_dimension_numbers<[1], [0], [0], [1], [0, 0, 1, 1], [], []>} : vector<8x128xf32>, vector<128x128xf32>, vector<8x128xf32> -> vector<8x128xf32>
    %c0_14 = arith.constant 0 : index
    %c0_15 = arith.constant 0 : index
    %14 = vector.load %arg7[%c0_14, %c0_15] : memref<1x128xf32, #tpu.memory_space<vmem>>, vector<1x128xf32>
    %15 = vector.broadcast %14 : vector<1x128xf32> to vector<8x128xf32>
    %16 = arith.addf %13, %15 : vector<8x128xf32>
    %cst_16 = arith.constant 0.000000e+00 : f32
    %17 = vector.broadcast %cst_16 : f32 to vector<8x128xf32>
    %18 = arith.maximumf %16, %17 : vector<8x128xf32>
    %c0_17 = arith.constant 0 : index
    %c0_18 = arith.constant 0 : index
    %19 = vector.load %arg8[%c0_17, %c0_18] : memref<1x128xf32, #tpu.memory_space<vmem>>, vector<1x128xf32>
    %20 = vector.broadcast %19 : vector<1x128xf32> to vector<8x128xf32>
    %21 = arith.mulf %18, %20 : vector<8x128xf32>
    %cst_19 = arith.constant dense<0.000000e+00> : vector<8xf32>
    %22 = vector.multi_reduction <add>, %21, %cst_19 [1] : vector<8x128xf32> to vector<8xf32>
    %23 = vector.shape_cast %22 : vector<8xf32> to vector<1x8xf32>
    %c0_20 = arith.constant 0 : index
    %c0_21 = arith.constant 0 : index
    %24 = vector.load %arg9[%c0_20, %c0_21] : memref<1x1xf32, #tpu.memory_space<vmem>>, vector<1x1xf32>
    %25 = vector.broadcast %24 : vector<1x1xf32> to vector<1x8xf32>
    %26 = arith.addf %23, %25 : vector<1x8xf32>
    %c0_22 = arith.constant 0 : index
    %c0_23 = arith.constant 0 : index
    %27 = vector.load %arg10[%c0_22, %c0_23] : memref<1x8xf32, #tpu.memory_space<vmem>>, vector<1x8xf32>
    tpu.vector_store %arg10[%c0_22, %c0_23], %26 {strides = array<i32>} : memref<1x8xf32, #tpu.memory_space<vmem>>, vector<1x8xf32>,
    return
  }
  func.func @transform_0(%arg0: i32) -> (i32, i32) {
    %c0_i32 = arith.constant 0 : i32
    %c0_i32_0 = arith.constant 0 : i32
    return %arg0, %c0_i32 : i32, i32
  }
  func.func @transform_1(%arg0: i32) -> (i32, i32) {
    %c0_i32 = arith.constant 0 : i32
    %c0_i32_0 = arith.constant 0 : i32
    return %arg0, %c0_i32 : i32, i32
  }
  func.func @transform_2(%arg0: i32) -> (i32, i32) {
    %c0_i32 = arith.constant 0 : i32
    %c0_i32_0 = arith.constant 0 : i32
    %c0_i32_1 = arith.constant 0 : i32
    return %c0_i32, %c0_i32_0 : i32, i32
  }
  func.func @transform_3(%arg0: i32) -> (i32, i32) {
    %c0_i32 = arith.constant 0 : i32
    %c0_i32_0 = arith.constant 0 : i32
    %c0_i32_1 = arith.constant 0 : i32
    return %c0_i32, %c0_i32_0 : i32, i32
  }
  func.func @transform_4(%arg0: i32) -> (i32, i32) {
    %c0_i32 = arith.constant 0 : i32
    %c0_i32_0 = arith.constant 0 : i32
    %c0_i32_1 = arith.constant 0 : i32
    return %c0_i32, %c0_i32_0 : i32, i32
  }
  func.func @transform_5(%arg0: i32) -> (i32, i32) {
    %c0_i32 = arith.constant 0 : i32
    %c0_i32_0 = arith.constant 0 : i32
    %c0_i32_1 = arith.constant 0 : i32
    return %c0_i32, %c0_i32_0 : i32, i32
  }
  func.func @transform_6(%arg0: i32) -> (i32, i32) {
    %c0_i32 = arith.constant 0 : i32
    %c0_i32_0 = arith.constant 0 : i32
    %c0_i32_1 = arith.constant 0 : i32
    return %c0_i32, %c0_i32_0 : i32, i32
  }
  func.func @transform_7(%arg0: i32) -> (i32, i32) {
    %c0_i32 = arith.constant 0 : i32
    %c0_i32_0 = arith.constant 0 : i32
    %c0_i32_1 = arith.constant 0 : i32
    return %c0_i32, %c0_i32_0 : i32, i32
  }
  func.func @transform_8(%arg0: i32) -> (i32, i32) {
    %c0_i32 = arith.constant 0 : i32
    %c0_i32_0 = arith.constant 0 : i32
    %c0_i32_1 = arith.constant 0 : i32
    return %c0_i32, %c0_i32_0 : i32, i32
  }
  func.func @transform_9(%arg0: i32) -> (i32, i32) {
    %c0_i32 = arith.constant 0 : i32
    %c0_i32_0 = arith.constant 0 : i32
    return %arg0, %c0_i32 : i32, i32
  }
}

</mosaic_0001>

<llo_original>
// kernel: qnetwork_forward.1
$region0: #{qnetwork_forward.1}
  #allocation0 [shape = 'u32[]', space=smem, size = 0x4, offset = 0x4, fixed_abs, tag = 'smem constant byte address 0x4 - core index']
  #allocation1 [shape = 'u32[144,128]{1,0:T(1,128)}', space=vmem, size = 0x12000, scoped, tag = 'internal scratch']
  #allocation2 [shape = 'f32[1,1]{1,0:T(1,128)S(1)}', space=vmem, size = 0x200, scoped, tag = 'scoped memory for qnetwork_forward.1']
  %s0 = inlined_call_operand.vmem [shape: f32[8,16], index: 0, kind: input, shape index: {}]
  %s1 = inlined_call_operand.vmem [shape: f32[8,8], index: 1, kind: input, shape index: {}]
  %s2 = inlined_call_operand.vmem [shape: f32[16,128], index: 2, kind: input, shape index: {}]
  %s3 = inlined_call_operand.vmem [shape: f32[8,128], index: 3, kind: input, shape index: {}]
  %s4 = inlined_call_operand.vmem [shape: f32[1,128], index: 4, kind: input, shape index: {}]
  %s5 = inlined_call_operand.vmem [shape: f32[128,128], index: 5, kind: input, shape index: {}]
  %s6 = inlined_call_operand.vmem [shape: f32[1,128], index: 6, kind: input, shape index: {}]
  %s7 = inlined_call_operand.vmem [shape: f32[1,128], index: 7, kind: input, shape index: {}]
  %s8 = inlined_call_operand.<no memory space> [shape: f32[1,1], index: 8, kind: input, shape index: {}]
  %s9 = inlined_call_operand.hbm [shape: f32[1,8], index: 9, kind: output, shape index: {}]
  %s10 = sld [smem:[#allocation0]]
  $region46: #{qnetwork_forward.1} parent=0
    _
  %s12 = ssub.s32 1, %s10
  %s13 = scalar_select 0, %s12, %s10
  %v14 = vstv %s8
  %15 = vst [vmem:[#allocation2] sm:$0x1] %v14
  $region1: #{qnetwork_forward.1} parent=0
    #allocation3 [shape = 'u8[512]{0}', space=vmem, size = 0x400, scoped, tag = 'output window, operand 0, single buffered']
    #allocation4 [shape = 's32[1]{0}', space=sflag, size = 0x4, scoped, tag = 'scoped memory for qnetwork_forward.1']
    %16 = vsyncpa [#allocation4], 0
    // Predicated region
    $region2: #{qnetwork_forward.1} parent=1 // pred_check
      _
    $region3: #{qnetwork_forward.1} parent=1 // pred_check_branch
      %18 = sbr.rel (0) target = $region5
    $region4: #{qnetwork_forward.1} parent=1 // pred_region
      _
    $region5: #{qnetwork_forward.1} parent=1 // pred_fallthru
      _
    // Predicated region
    $region6: #{qnetwork_forward.1} parent=1 // pred_check
      _
    $region7: #{qnetwork_forward.1} parent=1 // pred_check_branch
      %20 = sbr.rel (0) target = $region9
    $region8: #{qnetwork_forward.1} parent=1 // pred_region
      _
    $region9: #{qnetwork_forward.1} parent=1 // pred_fallthru
      _
    // Predicated region
    $region10: #{qnetwork_forward.1} parent=1 // pred_check
      _
    $region11: #{qnetwork_forward.1} parent=1 // pred_check_branch
      %22 = sbr.rel (0) target = $region13
    $region12: #{qnetwork_forward.1} parent=1 // pred_region
      _
    $region13: #{qnetwork_forward.1} parent=1 // pred_fallthru
      _
    // Predicated region
    $region14: #{qnetwork_forward.1} parent=1 // pred_check
      _
    $region15: #{qnetwork_forward.1} parent=1 // pred_check_branch
      %24 = sbr.rel (0) target = $region17
    $region16: #{qnetwork_forward.1} parent=1 // pred_region
      _
    $region17: #{qnetwork_forward.1} parent=1 // pred_fallthru
      _
    // Predicated region
    $region18: #{qnetwork_forward.1} parent=1 // pred_check
      _
    $region19: #{qnetwork_forward.1} parent=1 // pred_check_branch
      %26 = sbr.rel (0) target = $region21
    $region20: #{qnetwork_forward.1} parent=1 // pred_region
      _
    $region21: #{qnetwork_forward.1} parent=1 // pred_fallthru
      _
    // Predicated region
    $region22: #{qnetwork_forward.1} parent=1 // pred_check
      _
    $region23: #{qnetwork_forward.1} parent=1 // pred_check_branch
      %28 = sbr.rel (0) target = $region25
    $region24: #{qnetwork_forward.1} parent=1 // pred_region
      _
    $region25: #{qnetwork_forward.1} parent=1 // pred_fallthru
      _
    // Predicated region
    $region26: #{qnetwork_forward.1} parent=1 // pred_check
      _
    $region27: #{qnetwork_forward.1} parent=1 // pred_check_branch
      %30 = sbr.rel (0) target = $region29
    $region28: #{qnetwork_forward.1} parent=1 // pred_region
      _
    $region29: #{qnetwork_forward.1} parent=1 // pred_fallthru
      _
    // Predicated region
    $region30: #{qnetwork_forward.1} parent=1 // pred_check
      _
    $region31: #{qnetwork_forward.1} parent=1 // pred_check_branch
      %32 = sbr.rel (0) target = $region33
    $region32: #{qnetwork_forward.1} parent=1 // pred_region
      _
    $region33: #{qnetwork_forward.1} parent=1 // pred_fallthru
      _
    // Predicated region
    $region34: #{qnetwork_forward.1} parent=1 // pred_check
      _
    $region35: #{qnetwork_forward.1} parent=1 // pred_check_branch
      %34 = sbr.rel (0) target = $region37
    $region36: #{qnetwork_forward.1} parent=1 // pred_region
      _
    $region37: #{qnetwork_forward.1} parent=1 // pred_fallthru
      _
    %v35 = vld [vmem:[%s0] sm:$0xff]
    %v36 = vld [vmem:[%s2] sm:$0xff]
    %v37 = vld [vmem:[%s2 + $0x8] sm:$0xff]
    %v38 = vld [vmem:[%s1] sm:$0xff]
    %v39 = vld [vmem:[%s3] sm:$0xff]
    %vm40 = vcmask 64512
    %v42 = vsel %vm40, %v38, 0
    %44 = vmatprep.subr.mxu0 0.0
    %45 = vmatpush1.msra.mxu0 %v39
    %46 = vmatprep.subr.mxu0 0.0
    %47 = vmatpush1.msra.mxu0 0.0
    %48 = vmatprep.subr.mxu0 0.0
    %49 = vmatpush1.msra.mxu0 0.0
    %50 = vmatprep.subr.mxu0 0.0
    %51 = vmatpush1.msra.mxu0 0.0
    %52 = vmatprep.subr.mxu0 0.0
    %53 = vmatpush1.msra.mxu0 0.0
    %54 = vmatprep.subr.mxu0 0.0
    %55 = vmatpush1.msra.mxu0 0.0
    %56 = vmatprep.subr.mxu0 0.0
    %57 = vmatpush1.msra.mxu0 0.0
    %58 = vmatprep.subr.mxu0 0.0
    %59 = vmatpush1.msra.mxu0 0.0
    %60 = vmatprep.subr.mxu0 0.0
    %61 = vmatpush1.msra.mxu0 0.0
    %62 = vmatprep.subr.mxu0 0.0
    %63 = vmatpush1.msra.mxu0 0.0
    %64 = vmatprep.subr.mxu0 0.0
    %65 = vmatpush1.msra.mxu0 0.0
    %66 = vmatprep.subr.mxu0 0.0
    %67 = vmatpush1.msra.mxu0 0.0
    %68 = vmatprep.subr.mxu0 0.0
    %69 = vmatpush1.msra.mxu0 0.0
    %70 = vmatprep.subr.mxu0 0.0
    %71 = vmatpush1.msra.mxu0 0.0
    %72 = vmatprep.subr.mxu0 0.0
    %73 = vmatpush1.msra.mxu0 0.0
    %74 = vmatprep.subr.mxu0 0.0
    %75 = vmatpush1.msra.mxu0 0.0
    %76 = vmatprep.subr.mxu0 0.0
    %77 = vmatpush1.msra.mxu0 0.0
    %78 = vmatprep.subr.mxu0 0.0
    %79 = vmatpush1.msra.mxu0 0.0
    %80 = vmatprep.subr.mxu0 0.0
    %81 = vmatpush1.msra.mxu0 0.0
    %82 = vmatprep.subr.mxu0 0.0
    %83 = vmatpush1.msra.mxu0 0.0
    %84 = vmatprep.subr.mxu0 0.0
    %85 = vmatpush1.msra.mxu0 0.0
    %86 = vmatprep.subr.mxu0 0.0
    %87 = vmatpush1.msra.mxu0 0.0
    %88 = vmatprep.subr.mxu0 0.0
    %89 = vmatpush1.msra.mxu0 0.0
    %90 = vmatprep.subr.mxu0 0.0
    %91 = vmatpush1.msra.mxu0 0.0
    %92 = vmatprep.subr.mxu0 0.0
    %93 = vmatpush1.msra.mxu0 0.0
    %94 = vmatprep.subr.mxu0 0.0
    %95 = vmatpush1.msra.mxu0 0.0
    %96 = vmatprep.subr.mxu0 0.0
    %97 = vmatpush1.msra.mxu0 0.0
    %98 = vmatprep.subr.mxu0 0.0
    %99 = vmatpush1.msra.mxu0 0.0
    %100 = vmatprep.subr.mxu0 0.0
    %101 = vmatpush1.msra.mxu0 0.0
    %102 = vmatprep.subr.mxu0 0.0
    %103 = vmatpush1.msra.mxu0 0.0
    %104 = vmatprep.subr.mxu0 0.0
    %105 = vmatpush1.msra.mxu0 0.0
    %106 = vmatprep.subr.mxu0 0.0
    %107 = vmatpush1.msra.mxu0 0.0
    %108 = vmatprep.mubr.f32.mxu0 0.0
    %109 = vmatmul.mubr.f32.gmra.mrb[0].mxu0 %v42
    %v110 = vpop.f32.mrb[0].mxu0
    %v111 = vadd.f32 0.0, %v110
    %v112 = vpop.f32.mrb[0].mxu0
    %113 = vdwg.mxu0
    %vm114 = vcmask 130048
    %v116 = vsel %vm114, %v35, 0
    %118 = vmatprep.subr.mxu0 0.0
    %119 = vmatpush1.msra.mxu0 %v36
    %120 = vmatprep.subr.mxu0 0.0
    %121 = vmatpush1.msra.mxu0 %v37
    %122 = vmatprep.subr.mxu0 0.0
    %123 = vmatpush1.msra.mxu0 0.0
    %124 = vmatprep.subr.mxu0 0.0
    %125 = vmatpush1.msra.mxu0 0.0
    %126 = vmatprep.subr.mxu0 0.0
    %127 = vmatpush1.msra.mxu0 0.0
    %128 = vmatprep.subr.mxu0 0.0
    %129 = vmatpush1.msra.mxu0 0.0
    %130 = vmatprep.subr.mxu0 0.0
    %131 = vmatpush1.msra.mxu0 0.0
    %132 = vmatprep.subr.mxu0 0.0
    %133 = vmatpush1.msra.mxu0 0.0
    %134 = vmatprep.subr.mxu0 0.0
    %135 = vmatpush1.msra.mxu0 0.0
    %136 = vmatprep.subr.mxu0 0.0
    %137 = vmatpush1.msra.mxu0 0.0
    %138 = vmatprep.subr.mxu0 0.0
    %139 = vmatpush1.msra.mxu0 0.0
    %140 = vmatprep.subr.mxu0 0.0
    %141 = vmatpush1.msra.mxu0 0.0
    %142 = vmatprep.subr.mxu0 0.0
    %143 = vmatpush1.msra.mxu0 0.0
    %144 = vmatprep.subr.mxu0 0.0
    %145 = vmatpush1.msra.mxu0 0.0
    %146 = vmatprep.subr.mxu0 0.0
    %147 = vmatpush1.msra.mxu0 0.0
    %148 = vmatprep.subr.mxu0 0.0
    %149 = vmatpush1.msra.mxu0 0.0
    %150 = vmatprep.subr.mxu0 0.0
    %151 = vmatpush1.msra.mxu0 0.0
    %152 = vmatprep.subr.mxu0 0.0
    %153 = vmatpush1.msra.mxu0 0.0
    %154 = vmatprep.subr.mxu0 0.0
    %155 = vmatpush1.msra.mxu0 0.0
    %156 = vmatprep.subr.mxu0 0.0
    %157 = vmatpush1.msra.mxu0 0.0
    %158 = vmatprep.subr.mxu0 0.0
    %159 = vmatpush1.msra.mxu0 0.0
    %160 = vmatprep.subr.mxu0 0.0
    %161 = vmatpush1.msra.mxu0 0.0
    %162 = vmatprep.subr.mxu0 0.0
    %163 = vmatpush1.msra.mxu0 0.0
    %164 = vmatprep.subr.mxu0 0.0
    %165 = vmatpush1.msra.mxu0 0.0
    %166 = vmatprep.subr.mxu0 0.0
    %167 = vmatpush1.msra.mxu0 0.0
    %168 = vmatprep.subr.mxu0 0.0
    %169 = vmatpush1.msra.mxu0 0.0
    %170 = vmatprep.subr.mxu0 0.0
    %171 = vmatpush1.msra.mxu0 0.0
    %172 = vmatprep.subr.mxu0 0.0
    %173 = vmatpush1.msra.mxu0 0.0
    %174 = vmatprep.subr.mxu0 0.0
    %175 = vmatpush1.msra.mxu0 0.0
    %176 = vmatprep.subr.mxu0 0.0
    %177 = vmatpush1.msra.mxu0 0.0
    %178 = vmatprep.subr.mxu0 0.0
    %179 = vmatpush1.msra.mxu0 0.0
    %180 = vmatprep.subr.mxu0 0.0
    %181 = vmatpush1.msra.mxu0 0.0
    %182 = vmatprep.mubr.f32.mxu0 0.0
    %183 = vmatmul.mubr.f32.gmra.mrb[0].mxu0 %v116
    %v184 = vpop.f32.mrb[0].mxu0
    %v185 = vadd.f32 %v111, %v184
    %v186 = vpop.f32.mrb[0].mxu0
    %187 = vdwg.mxu0
    %v188 = vld [vmem:[%s4] sm:$0x1]
    %v190 = vlaneseq
    %v191 = vshrl.u32 %v190, 7
    %v192 = vsub.s32 0, %v191
    %v193 = vrot.slane %v188, %v192
    %v195 = vadd.f32 %v185, %v193
    %v196 = vmax.f32 %v195, 0.0
    %v197 = vld [vmem:[%s5] sm:$0xff]
    %v198 = vld [vmem:[%s5 + $0x8] sm:$0xff]
    %v199 = vld [vmem:[%s5 + $0x10] sm:$0xff]
    %v200 = vld [vmem:[%s5 + $0x18] sm:$0xff]
    %v201 = vld [vmem:[%s5 + $0x20] sm:$0xff]
    %v202 = vld [vmem:[%s5 + $0x28] sm:$0xff]
    %v203 = vld [vmem:[%s5 + $0x30] sm:$0xff]
    %v204 = vld [vmem:[%s5 + $0x38] sm:$0xff]
    %v205 = vld [vmem:[%s5 + $0x40] sm:$0xff]
    %v206 = vld [vmem:[%s5 + $0x48] sm:$0xff]
    %v207 = vld [vmem:[%s5 + $0x50] sm:$0xff]
    %v208 = vld [vmem:[%s5 + $0x58] sm:$0xff]
    %v209 = vld [vmem:[%s5 + $0x60] sm:$0xff]
    %v210 = vld [vmem:[%s5 + $0x68] sm:$0xff]
    %v211 = vld [vmem:[%s5 + $0x70] sm:$0xff]
    %v212 = vld [vmem:[%s5 + $0x78] sm:$0xff]
    %v213 = vld [vmem:[%s6] sm:$0x1]
    %v215 = vlaneseq
    %v216 = vshrl.u32 %v215, 7
    %v217 = vsub.s32 0, %v216
    %v218 = vrot.slane %v213, %v217
    %220 = vmatprep.subr.mxu0 0.0
    %221 = vmatpush1.msra.mxu0 %v197
    %222 = vmatprep.subr.mxu0 0.0
    %223 = vmatpush1.msra.mxu0 %v198
    %224 = vmatprep.subr.mxu0 0.0
    %225 = vmatpush1.msra.mxu0 %v199
    %226 = vmatprep.subr.mxu0 0.0
    %227 = vmatpush1.msra.mxu0 %v200
    %228 = vmatprep.subr.mxu0 0.0
    %229 = vmatpush1.msra.mxu0 %v201
    %230 = vmatprep.subr.mxu0 0.0
    %231 = vmatpush1.msra.mxu0 %v202
    %232 = vmatprep.subr.mxu0 0.0
    %233 = vmatpush1.msra.mxu0 %v203
    %234 = vmatprep.subr.mxu0 0.0
    %235 = vmatpush1.msra.mxu0 %v204
    %236 = vmatprep.subr.mxu0 0.0
    %237 = vmatpush1.msra.mxu0 %v205
    %238 = vmatprep.subr.mxu0 0.0
    %239 = vmatpush1.msra.mxu0 %v206
    %240 = vmatprep.subr.mxu0 0.0
    %241 = vmatpush1.msra.mxu0 %v207
    %242 = vmatprep.subr.mxu0 0.0
    %243 = vmatpush1.msra.mxu0 %v208
    %244 = vmatprep.subr.mxu0 0.0
    %245 = vmatpush1.msra.mxu0 %v209
    %246 = vmatprep.subr.mxu0 0.0
    %247 = vmatpush1.msra.mxu0 %v210
    %248 = vmatprep.subr.mxu0 0.0
    %249 = vmatpush1.msra.mxu0 %v211
    %250 = vmatprep.subr.mxu0 0.0
    %251 = vmatpush1.msra.mxu0 %v212
    %252 = vmatprep.subr.mxu0 0.0
    %253 = vmatpush1.msra.mxu0 0.0
    %254 = vmatprep.subr.mxu0 0.0
    %255 = vmatpush1.msra.mxu0 0.0
    %256 = vmatprep.subr.mxu0 0.0
    %257 = vmatpush1.msra.mxu0 0.0
    %258 = vmatprep.subr.mxu0 0.0
    %259 = vmatpush1.msra.mxu0 0.0
    %260 = vmatprep.subr.mxu0 0.0
    %261 = vmatpush1.msra.mxu0 0.0
    %262 = vmatprep.subr.mxu0 0.0
    %263 = vmatpush1.msra.mxu0 0.0
    %264 = vmatprep.subr.mxu0 0.0
    %265 = vmatpush1.msra.mxu0 0.0
    %266 = vmatprep.subr.mxu0 0.0
    %267 = vmatpush1.msra.mxu0 0.0
    %268 = vmatprep.subr.mxu0 0.0
    %269 = vmatpush1.msra.mxu0 0.0
    %270 = vmatprep.subr.mxu0 0.0
    %271 = vmatpush1.msra.mxu0 0.0
    %272 = vmatprep.subr.mxu0 0.0
    %273 = vmatpush1.msra.mxu0 0.0
    %274 = vmatprep.subr.mxu0 0.0
    %275 = vmatpush1.msra.mxu0 0.0
    %276 = vmatprep.subr.mxu0 0.0
    %277 = vmatpush1.msra.mxu0 0.0
    %278 = vmatprep.subr.mxu0 0.0
    %279 = vmatpush1.msra.mxu0 0.0
    %280 = vmatprep.subr.mxu0 0.0
    %281 = vmatpush1.msra.mxu0 0.0
    %282 = vmatprep.subr.mxu0 0.0
    %283 = vmatpush1.msra.mxu0 0.0
    %284 = vmatprep.mubr.f32.mxu0 0.0
    %285 = vmatmul.mubr.f32.gmra.mrb[0].mxu0 %v196
    %v286 = vpop.f32.mrb[0].mxu0
    %v287 = vadd.f32 %v218, %v286
    %v288 = vpop.f32.mrb[0].mxu0
    %289 = vdwg.mxu0
    %v290 = vmax.f32 %v287, 0.0
    %v291 = vld [vmem:[%s7] sm:$0x1]
    %v293 = vlaneseq
    %v294 = vshrl.u32 %v293, 7
    %v295 = vsub.s32 0, %v294
    %v296 = vrot.slane %v291, %v295
    %v298 = vmul.f32 %v290, %v296
    %299 = vadd.xlane.f32.xlu0 %v298
    %v300 = vpop.xlane.xlu0 %299
    %v301 = vld [vmem:[#allocation2] sm:$0x1]
    %303 = vset.pattern.permute.xlu0 0
    %304 = vperm.xlu0 %303, %v301
    %v305 = vpop.permute.xlu0 %304
    %v307 = vlaneseq
    %v308 = vshrl.u32 %v307, 7
    %v309 = vsub.s32 0, %v308
    %v310 = vrot.slane %v305, %v309
    %v311 = vadd.f32 %v300, %v310
    %v313 = vlaneseq
    %v314 = vand.u32 %v313, 127
    %v315 = vlaneseq
    %v316 = vshrl.u32 %v315, 7
    %v317 = vsub.s32 %v314, %v316
    %v318 = vrot.slane %v311, %v317
    %vm320 = vcmask 57344
    %321 = vst.msk [vmem:[#allocation3] sm:$0x1] %vm320, %v318
    // Predicated region
    $region38: #{qnetwork_forward.1} parent=1 // pred_check
      _
    $region39: #{qnetwork_forward.1} parent=1 // pred_check_branch
      %323 = sbr.rel (0) target = $region41
    $region40: #{qnetwork_forward.1} parent=1 // pred_region
      %s325 = ssub.s32 16, 16
      %326 = vsyncadd [#allocation4], %s325
      %s328 = sshll.u32 [#allocation3], 4
      %s329 = int_to_ptr.vmem [resolvable:$true] %s328
      %331 = dma.vmem_to_hbm [thread:$0]  %s329, 16, %s9, [#allocation4]
    $region41: #{qnetwork_forward.1} parent=1 // pred_fallthru
      _
    // Predicated region
    $region42: #{qnetwork_forward.1} parent=1 // pred_check
      _
    $region43: #{qnetwork_forward.1} parent=1 // pred_check_branch
      %333 = sbr.rel (0) target = $region45
    $region44: #{qnetwork_forward.1} parent=1 // pred_region
      %334 = dma.done [#allocation4], 16
    $region45: #{qnetwork_forward.1} parent=1 // pred_fallthru
      _
    %335 = vsyncpa [#allocation4], 1

</llo_original>
